<compile_context>
chip_gen: v6e
topology: v6e:2x2x1
jax: 0.10.0
libtpu: 0.0.40
codegen_flags: <defaults>
</compile_context>

<pallas_src>
import functools
import math

import jax
import jax.numpy as jnp
from jax.experimental import pallas as pl
from jax.experimental.pallas import tpu as pltpu  # noqa: F401  (not needed at this size)

# ----------------------------- config (small, deterministic) -----------------------------
BATCH = 2
SEQ = 8
HIDDEN = 32
NUM_HEADS = 2
HEAD_DIM = HIDDEN // NUM_HEADS
LN_EPS = 1e-12


# ----------------------------- fused attention-block kernel -----------------------------
def _sparse_attention_kernel(x_ref, mask_ref, wqkv_ref, bqkv_ref, wo_ref, ovec_ref,
                             out_ref, *, num_heads):
    """Fused SparseSelfAttention + SparseSelfOutput.

    x_ref    : (B*S, H)   flattened hidden states
    mask_ref : (B, S)     additive key-padding mask (0 keep / -1e4 masked)
    wqkv_ref : (H, 3H)    [Wq | Wk | Wv]
    bqkv_ref : (1, 3H)    [bq | bk | bv]
    wo_ref   : (NH, DH, H) output projection, grouped per head
    ovec_ref : (3, H)     [bo ; ln_gamma ; ln_beta]
    out_ref  : (B*S, H)
    """
    bs, hidden = x_ref.shape
    batch, seq = mask_ref.shape
    head_dim = hidden // num_heads

    x = x_ref[...].astype(jnp.float32)                    # (B*S, H)
    m = mask_ref[...].astype(jnp.float32)                 # (B, S)

    # --- fused QKV projection: one MXU matmul over all 16 rows ---
    qkv = jnp.dot(x, wqkv_ref[...], preferred_element_type=jnp.float32) + bqkv_ref[0]

    scale = 1.0 / math.sqrt(head_dim)
    y = jnp.zeros((bs, hidden), jnp.float32)

    # Per-head attention (num_heads=2, statically unrolled); batch handled by einsum
    # batch dims.  Head-merge/concat is absorbed into the per-head output projection.
    for h in range(num_heads):
        q = (qkv[:, h * head_dim:(h + 1) * head_dim] * scale).reshape(batch, seq, head_dim)
        k = qkv[:, hidden + h * head_dim: hidden + (h + 1) * head_dim].reshape(
            batch, seq, head_dim)
        v = qkv[:, 2 * hidden + h * head_dim: 2 * hidden + (h + 1) * head_dim].reshape(
            batch, seq, head_dim)

        s = jnp.einsum('bqd,bkd->bqk', q, k, preferred_element_type=jnp.float32)
        s = s + m[:, None, :]                              # key-padding mask, 'add' mode
        s = s - jnp.max(s, axis=-1, keepdims=True)
        p = jnp.exp(s)
        p = p * pl.reciprocal(jnp.sum(p, axis=-1, keepdims=True), approx=True)
        ctx = jnp.einsum('bqk,bkd->bqd', p, v, preferred_element_type=jnp.float32)

        # accumulate ctx_h @ Wo[h]  ==  (concat_h ctx_h) @ Wo   (no concatenate needed)
        y = y + jnp.dot(ctx.reshape(bs, head_dim), wo_ref[h],
                        preferred_element_type=jnp.float32)

    # --- SparseSelfOutput: dense bias + (dropout=identity) + residual + LayerNorm ---
    y = y + ovec_ref[0]                                    # bo
    y = y + x                                              # residual (input hidden states)
    mu = jnp.mean(y, axis=-1, keepdims=True)
    var = jnp.mean((y - mu) * (y - mu), axis=-1, keepdims=True)
    yn = (y - mu) * jax.lax.rsqrt(var + LN_EPS)
    out = yn * ovec_ref[1] + ovec_ref[2]                   # gamma, beta
    out_ref[...] = out.astype(out_ref.dtype)


# ----------------------------- wrapper -----------------------------
def sparse_attention_forward(hidden_states, attention_mask, params):
    """SparseAttention.forward -> (attention_output,)

    hidden_states : [B, S, H] float32
    attention_mask: [B or 1, 1, 1, S] additive mask (0 = keep, -1e4 = masked)
    """
    B, S, H = hidden_states.shape
    NH, DH = NUM_HEADS, HEAD_DIM

    # transpose_mask_for_sparse: squeeze to (B, S); repeat along batch if needed.
    mask = attention_mask.reshape(attention_mask.shape[0], S)
    mask = jnp.broadcast_to(mask, (B, S)).astype(hidden_states.dtype)

    # Wrapper-side parameter packing / re-layout (pure plumbing, done in XLA).
    wqkv = jnp.concatenate([params["wq"], params["wk"], params["wv"]], axis=1)     # (H, 3H)
    bqkv = jnp.concatenate([params["bq"], params["bk"], params["bv"]], axis=1)     # (1, 3H)
    wo_heads = params["wo"].reshape(NH, DH, H)                                     # (NH,DH,H)
    ovec = jnp.concatenate([params["bo"], params["ln_g"], params["ln_b"]], axis=0)  # (3, H)

    x2 = hidden_states.reshape(B * S, H)   # lane/sublane-preserving flatten

    out2 = pl.pallas_call(
        functools.partial(_sparse_attention_kernel, num_heads=NH),
        out_shape=jax.ShapeDtypeStruct((B * S, H), hidden_states.dtype),
        # No grid / BlockSpecs: whole-array blocks, everything resident in VMEM for a
        # single invocation (problem size ~100 KB fp32).
    )(x2, mask, wqkv, bqkv, wo_heads, ovec)

    attention_output = out2.reshape(B, S, H)
    return (attention_output,)


# ----------------------------- deterministic parameter init -----------------------------
def init_params(key, hidden):
    ks = jax.random.split(key, 4)
    std = 0.02
    return {
        "wq": std * jax.random.normal(ks[0], (hidden, hidden), jnp.float32),
        "bq": jnp.zeros((1, hidden), jnp.float32),
        "wk": std * jax.random.normal(ks[1], (hidden, hidden), jnp.float32),
        "bk": jnp.zeros((1, hidden), jnp.float32),
        "wv": std * jax.random.normal(ks[2], (hidden, hidden), jnp.float32),
        "bv": jnp.zeros((1, hidden), jnp.float32),
        "wo": std * jax.random.normal(ks[3], (hidden, hidden), jnp.float32),
        "bo": jnp.zeros((1, hidden), jnp.float32),
        "ln_g": jnp.ones((1, hidden), jnp.float32),
        "ln_b": jnp.zeros((1, hidden), jnp.float32),
    }


if __name__ == "__main__":
    key = jax.random.PRNGKey(0)
    k_x, k_params = jax.random.split(key)

    hidden_states = jax.random.normal(k_x, (BATCH, SEQ, HIDDEN), jnp.float32)

    # Extended additive attention mask (B, 1, 1, S): last two key positions of batch 1 masked.
    valid = jnp.ones((BATCH, SEQ), jnp.float32).at[1, -2:].set(0.0)
    attention_mask = ((1.0 - valid) * -10000.0).reshape(BATCH, 1, 1, SEQ)

    params = init_params(k_params, HIDDEN)

    outputs = sparse_attention_forward(hidden_states, attention_mask, params)
    attn_out = jax.block_until_ready(outputs[0])
    assert attn_out.shape == (BATCH, SEQ, HIDDEN)
    assert bool(jnp.all(jnp.isfinite(attn_out)))
    print("KERNEL_OK")
</pallas_src>

<mosaic_0001>
module attributes {stable_mosaic.version = 11 : i64} {
  func.func @_sparse_attention_kernel(%arg0: memref<16x32xf32, #tpu.memory_space<vmem>>, %arg1: memref<2x8xf32, #tpu.memory_space<vmem>>, %arg2: memref<32x96xf32, #tpu.memory_space<vmem>>, %arg3: memref<1x96xf32, #tpu.memory_space<vmem>>, %arg4: memref<2x16x32xf32, #tpu.memory_space<vmem>>, %arg5: memref<3x32xf32, #tpu.memory_space<vmem>>, %arg6: memref<16x32xf32, #tpu.memory_space<vmem>>) attributes {dimension_semantics = [], scalar_prefetch = 0 : i64, scratch_operands = 0 : i64, tpu.core_type = #tpu.core_type<tc>} {
    %c0 = arith.constant 0 : index
    %c0_0 = arith.constant 0 : index
    %0 = vector.load %arg0[%c0, %c0_0] : memref<16x32xf32, #tpu.memory_space<vmem>>, vector<16x32xf32>
    %c0_1 = arith.constant 0 : index
    %c0_2 = arith.constant 0 : index
    %1 = vector.load %arg1[%c0_1, %c0_2] : memref<2x8xf32, #tpu.memory_space<vmem>>, vector<2x8xf32>
    %c0_3 = arith.constant 0 : index
    %c0_4 = arith.constant 0 : index
    %2 = vector.load %arg2[%c0_3, %c0_4] : memref<32x96xf32, #tpu.memory_space<vmem>>, vector<32x96xf32>
    %cst = arith.constant dense<0.000000e+00> : vector<16x96xf32>
    %3 = tpu.matmul %0, %2, %cst {dimension_numbers = #tpu.dot_dimension_numbers<[1], [0], [0], [1], [0, 0, 1, 1], [], []>} : vector<16x32xf32>, vector<32x96xf32>, vector<16x96xf32> -> vector<16x96xf32>
    %c0_5 = arith.constant 0 : index
    %c0_6 = arith.constant 0 : index
    %4 = vector.load %arg3[%c0_5, %c0_6] : memref<1x96xf32, #tpu.memory_space<vmem>>, vector<1x96xf32>
    %5 = vector.shape_cast %4 : vector<1x96xf32> to vector<96xf32>
    %6 = vector.shape_cast %5 : vector<96xf32> to vector<1x96xf32>
    %7 = vector.broadcast %6 : vector<1x96xf32> to vector<16x96xf32>
    %8 = arith.addf %3, %7 : vector<16x96xf32>
    %cst_7 = arith.constant 0.000000e+00 : f32
    %9 = vector.broadcast %cst_7 : f32 to vector<16x32xf32>
    %10 = vector.extract_strided_slice %8 {offsets = [0, 0], sizes = [16, 16], strides = [1, 1]} : vector<16x96xf32> to vector<16x16xf32>
    %cst_8 = arith.constant 2.500000e-01 : f32
    %11 = vector.broadcast %cst_8 : f32 to vector<16x16xf32>
    %12 = arith.mulf %10, %11 : vector<16x16xf32>
    %13 = vector.shape_cast %12 : vector<16x16xf32> to vector<2x8x16xf32>
    %14 = vector.extract_strided_slice %8 {offsets = [0, 32], sizes = [16, 16], strides = [1, 1]} : vector<16x96xf32> to vector<16x16xf32>
    %15 = vector.shape_cast %14 : vector<16x16xf32> to vector<2x8x16xf32>
    %16 = vector.extract_strided_slice %8 {offsets = [0, 64], sizes = [16, 16], strides = [1, 1]} : vector<16x96xf32> to vector<16x16xf32>
    %17 = vector.shape_cast %16 : vector<16x16xf32> to vector<2x8x16xf32>
    "tpu.trace_start"() <{level = 10 : i32, message = "bqd,bkd->bqk"}> : () -> ()
    %cst_9 = arith.constant dense<0.000000e+00> : vector<2x8x8xf32>
    %18 = tpu.matmul %13, %15, %cst_9 {dimension_numbers = #tpu.dot_dimension_numbers<[2], [2], [1], [1], [0, 0, 0, 1, 1, 1], [0], [0]>} : vector<2x8x16xf32>, vector<2x8x16xf32>, vector<2x8x8xf32> -> vector<2x8x8xf32>
    "tpu.trace_stop"() : () -> ()
    %19 = vector.shape_cast %1 : vector<2x8xf32> to vector<2x1x8xf32>
    %20 = vector.broadcast %19 : vector<2x1x8xf32> to vector<2x8x8xf32>
    %21 = arith.addf %18, %20 : vector<2x8x8xf32>
    %cst_10 = arith.constant dense<0xFF800000> : vector<2x8xf32>
    %22 = vector.multi_reduction <maximumf>, %21, %cst_10 [2] : vector<2x8x8xf32> to vector<2x8xf32>
    %23 = vector.shape_cast %22 : vector<2x8xf32> to vector<2x8x1xf32>
    %24 = vector.broadcast %23 : vector<2x8x1xf32> to vector<2x8x8xf32>
    %25 = arith.subf %21, %24 : vector<2x8x8xf32>
    %26 = math.exp %25 : vector<2x8x8xf32>
    %cst_11 = arith.constant dense<0.000000e+00> : vector<2x8xf32>
    %27 = vector.multi_reduction <add>, %26, %cst_11 [2] : vector<2x8x8xf32> to vector<2x8xf32>
    %28 = vector.shape_cast %27 : vector<2x8xf32> to vector<2x8x1xf32>
    %29 = tpu.reciprocal %28 {approx = true} : vector<2x8x1xf32> -> vector<2x8x1xf32>
    %30 = vector.broadcast %29 : vector<2x8x1xf32> to vector<2x8x8xf32>
    %31 = arith.mulf %26, %30 : vector<2x8x8xf32>
    "tpu.trace_start"() <{level = 10 : i32, message = "bqk,bkd->bqd"}> : () -> ()
    %cst_12 = arith.constant dense<0.000000e+00> : vector<2x8x16xf32>
    %32 = tpu.matmul %31, %17, %cst_12 {dimension_numbers = #tpu.dot_dimension_numbers<[2], [1], [1], [2], [0, 0, 0, 1, 1, 2], [0], [0]>} : vector<2x8x8xf32>, vector<2x8x16xf32>, vector<2x8x16xf32> -> vector<2x8x16xf32>
    "tpu.trace_stop"() : () -> ()
    %33 = vector.shape_cast %32 : vector<2x8x16xf32> to vector<16x16xf32>
    %c0_13 = arith.constant 0 : index
    %c0_14 = arith.constant 0 : index
    %c0_15 = arith.constant 0 : index
    %34 = vector.load %arg4[%c0_13, %c0_14, %c0_15] : memref<2x16x32xf32, #tpu.memory_space<vmem>>, vector<1x16x32xf32>
    %35 = vector.shape_cast %34 : vector<1x16x32xf32> to vector<16x32xf32>
    %cst_16 = arith.constant dense<0.000000e+00> : vector<16x32xf32>
    %36 = tpu.matmul %33, %35, %cst_16 {dimension_numbers = #tpu.dot_dimension_numbers<[1], [0], [0], [1], [0, 0, 1, 1], [], []>} : vector<16x16xf32>, vector<16x32xf32>, vector<16x32xf32> -> vector<16x32xf32>
    %37 = arith.addf %9, %36 : vector<16x32xf32>
    %38 = vector.extract_strided_slice %8 {offsets = [0, 16], sizes = [16, 16], strides = [1, 1]} : vector<16x96xf32> to vector<16x16xf32>
    %cst_17 = arith.constant 2.500000e-01 : f32
    %39 = vector.broadcast %cst_17 : f32 to vector<16x16xf32>
    %40 = arith.mulf %38, %39 : vector<16x16xf32>
    %41 = vector.shape_cast %40 : vector<16x16xf32> to vector<2x8x16xf32>
    %42 = vector.extract_strided_slice %8 {offsets = [0, 48], sizes = [16, 16], strides = [1, 1]} : vector<16x96xf32> to vector<16x16xf32>
    %43 = vector.shape_cast %42 : vector<16x16xf32> to vector<2x8x16xf32>
    %44 = vector.extract_strided_slice %8 {offsets = [0, 80], sizes = [16, 16], strides = [1, 1]} : vector<16x96xf32> to vector<16x16xf32>
    %45 = vector.shape_cast %44 : vector<16x16xf32> to vector<2x8x16xf32>
    "tpu.trace_start"() <{level = 10 : i32, message = "bqd,bkd->bqk"}> : () -> ()
    %cst_18 = arith.constant dense<0.000000e+00> : vector<2x8x8xf32>
    %46 = tpu.matmul %41, %43, %cst_18 {dimension_numbers = #tpu.dot_dimension_numbers<[2], [2], [1], [1], [0, 0, 0, 1, 1, 1], [0], [0]>} : vector<2x8x16xf32>, vector<2x8x16xf32>, vector<2x8x8xf32> -> vector<2x8x8xf32>
    "tpu.trace_stop"() : () -> ()
    %47 = vector.shape_cast %1 : vector<2x8xf32> to vector<2x1x8xf32>
    %48 = vector.broadcast %47 : vector<2x1x8xf32> to vector<2x8x8xf32>
    %49 = arith.addf %46, %48 : vector<2x8x8xf32>
    %cst_19 = arith.constant dense<0xFF800000> : vector<2x8xf32>
    %50 = vector.multi_reduction <maximumf>, %49, %cst_19 [2] : vector<2x8x8xf32> to vector<2x8xf32>
    %51 = vector.shape_cast %50 : vector<2x8xf32> to vector<2x8x1xf32>
    %52 = vector.broadcast %51 : vector<2x8x1xf32> to vector<2x8x8xf32>
    %53 = arith.subf %49, %52 : vector<2x8x8xf32>
    %54 = math.exp %53 : vector<2x8x8xf32>
    %cst_20 = arith.constant dense<0.000000e+00> : vector<2x8xf32>
    %55 = vector.multi_reduction <add>, %54, %cst_20 [2] : vector<2x8x8xf32> to vector<2x8xf32>
    %56 = vector.shape_cast %55 : vector<2x8xf32> to vector<2x8x1xf32>
    %57 = tpu.reciprocal %56 {approx = true} : vector<2x8x1xf32> -> vector<2x8x1xf32>
    %58 = vector.broadcast %57 : vector<2x8x1xf32> to vector<2x8x8xf32>
    %59 = arith.mulf %54, %58 : vector<2x8x8xf32>
    "tpu.trace_start"() <{level = 10 : i32, message = "bqk,bkd->bqd"}> : () -> ()
    %cst_21 = arith.constant dense<0.000000e+00> : vector<2x8x16xf32>
    %60 = tpu.matmul %59, %45, %cst_21 {dimension_numbers = #tpu.dot_dimension_numbers<[2], [1], [1], [2], [0, 0, 0, 1, 1, 2], [0], [0]>} : vector<2x8x8xf32>, vector<2x8x16xf32>, vector<2x8x16xf32> -> vector<2x8x16xf32>
    "tpu.trace_stop"() : () -> ()
    %61 = vector.shape_cast %60 : vector<2x8x16xf32> to vector<16x16xf32>
    %c1 = arith.constant 1 : index
    %c0_22 = arith.constant 0 : index
    %c0_23 = arith.constant 0 : index
    %62 = vector.load %arg4[%c1, %c0_22, %c0_23] : memref<2x16x32xf32, #tpu.memory_space<vmem>>, vector<1x16x32xf32>
    %63 = vector.shape_cast %62 : vector<1x16x32xf32> to vector<16x32xf32>
    %cst_24 = arith.constant dense<0.000000e+00> : vector<16x32xf32>
    %64 = tpu.matmul %61, %63, %cst_24 {dimension_numbers = #tpu.dot_dimension_numbers<[1], [0], [0], [1], [0, 0, 1, 1], [], []>} : vector<16x16xf32>, vector<16x32xf32>, vector<16x32xf32> -> vector<16x32xf32>
    %65 = arith.addf %37, %64 : vector<16x32xf32>
    %c0_25 = arith.constant 0 : index
    %c0_26 = arith.constant 0 : index
    %66 = vector.load %arg5[%c0_25, %c0_26] : memref<3x32xf32, #tpu.memory_space<vmem>>, vector<1x32xf32>
    %67 = vector.shape_cast %66 : vector<1x32xf32> to vector<32xf32>
    %68 = vector.shape_cast %67 : vector<32xf32> to vector<1x32xf32>
    %69 = vector.broadcast %68 : vector<1x32xf32> to vector<16x32xf32>
    %70 = arith.addf %65, %69 : vector<16x32xf32>
    %71 = arith.addf %70, %0 : vector<16x32xf32>
    %cst_27 = arith.constant dense<0.000000e+00> : vector<16xf32>
    %72 = vector.multi_reduction <add>, %71, %cst_27 [1] : vector<16x32xf32> to vector<16xf32>
    %73 = vector.shape_cast %72 : vector<16xf32> to vector<16x1xf32>
    %cst_28 = arith.constant 3.200000e+01 : f32
    %74 = vector.broadcast %cst_28 : f32 to vector<16x1xf32>
    %75 = arith.divf %73, %74 : vector<16x1xf32>
    %76 = vector.broadcast %75 : vector<16x1xf32> to vector<16x32xf32>
    %77 = arith.subf %71, %76 : vector<16x32xf32>
    %78 = vector.broadcast %75 : vector<16x1xf32> to vector<16x32xf32>
    %79 = arith.subf %71, %78 : vector<16x32xf32>
    %80 = arith.mulf %77, %79 : vector<16x32xf32>
    %cst_29 = arith.constant dense<0.000000e+00> : vector<16xf32>
    %81 = vector.multi_reduction <add>, %80, %cst_29 [1] : vector<16x32xf32> to vector<16xf32>
    %82 = vector.shape_cast %81 : vector<16xf32> to vector<16x1xf32>
    %cst_30 = arith.constant 3.200000e+01 : f32
    %83 = vector.broadcast %cst_30 : f32 to vector<16x1xf32>
    %84 = arith.divf %82, %83 : vector<16x1xf32>
    %85 = vector.broadcast %75 : vector<16x1xf32> to vector<16x32xf32>
    %86 = arith.subf %71, %85 : vector<16x32xf32>
    %cst_31 = arith.constant 9.99999996E-13 : f32
    %87 = vector.broadcast %cst_31 : f32 to vector<16x1xf32>
    %88 = arith.addf %84, %87 : vector<16x1xf32>
    %89 = math.rsqrt %88 : vector<16x1xf32>
    %90 = vector.broadcast %89 : vector<16x1xf32> to vector<16x32xf32>
    %91 = arith.mulf %86, %90 : vector<16x32xf32>
    %c1_32 = arith.constant 1 : index
    %c0_33 = arith.constant 0 : index
    %92 = vector.load %arg5[%c1_32, %c0_33] : memref<3x32xf32, #tpu.memory_space<vmem>>, vector<1x32xf32>
    %93 = vector.shape_cast %92 : vector<1x32xf32> to vector<32xf32>
    %94 = vector.shape_cast %93 : vector<32xf32> to vector<1x32xf32>
    %95 = vector.broadcast %94 : vector<1x32xf32> to vector<16x32xf32>
    %96 = arith.mulf %91, %95 : vector<16x32xf32>
    %c2 = arith.constant 2 : index
    %c0_34 = arith.constant 0 : index
    %97 = vector.load %arg5[%c2, %c0_34] : memref<3x32xf32, #tpu.memory_space<vmem>>, vector<1x32xf32>
    %98 = vector.shape_cast %97 : vector<1x32xf32> to vector<32xf32>
    %99 = vector.shape_cast %98 : vector<32xf32> to vector<1x32xf32>
    %100 = vector.broadcast %99 : vector<1x32xf32> to vector<16x32xf32>
    %101 = arith.addf %96, %100 : vector<16x32xf32>
    %c0_35 = arith.constant 0 : index
    %c0_36 = arith.constant 0 : index
    %102 = vector.load %arg6[%c0_35, %c0_36] : memref<16x32xf32, #tpu.memory_space<vmem>>, vector<16x32xf32>
    tpu.vector_store %arg6[%c0_35, %c0_36], %101 {strides = array<i32>} : memref<16x32xf32, #tpu.memory_space<vmem>>, vector<16x32xf32>,
    return
  }
}

</mosaic_0001>

<llo_original>
// kernel: tpu_custom_call.1
$region0: #{tpu_custom_call.1}
  #allocation0 [shape = 'u32[]', space=smem, size = 0x4, offset = 0x4, fixed_abs, tag = 'smem constant byte address 0x4 - core index']
  #allocation1 [shape = 'u32[144,128]{1,0:T(1,128)}', space=vmem, size = 0x12000, scoped, tag = 'internal scratch']
  %s0 = inlined_call_operand.hbm [shape: f32[16,32], index: 0, kind: input, shape index: {}]
  %s1 = inlined_call_operand.hbm [shape: f32[2,8], index: 1, kind: input, shape index: {}]
  %s2 = inlined_call_operand.hbm [shape: f32[32,96], index: 2, kind: input, shape index: {}]
  %s3 = inlined_call_operand.vmem [shape: f32[1,96], index: 3, kind: input, shape index: {}]
  %s4 = inlined_call_operand.hbm [shape: f32[2,16,32], index: 4, kind: input, shape index: {}]
  %s5 = inlined_call_operand.vmem [shape: f32[3,32], index: 5, kind: input, shape index: {}]
  %s6 = inlined_call_operand.hbm [shape: f32[16,32], index: 6, kind: output, shape index: {}]
  %s7 = sld [smem:[#allocation0]]
  $region50: #{tpu_custom_call.1} parent=0
    _
  %s9 = ssub.s32 1, %s7
  %s10 = scalar_select 0, %s9, %s7
  $region1: #{tpu_custom_call.1} parent=0
    #allocation2 [shape = 'u8[8192]{0}', space=vmem, size = 0x2000, scoped, tag = 'input window, operand 0, single buffered']
    #allocation3 [shape = 's32[1]{0}', space=sflag, size = 0x4, scoped, tag = 'scoped memory for tpu_custom_call.1']
    #allocation4 [shape = 's32[1]{0}', space=sflag, size = 0x4, scoped, tag = 'scoped memory for tpu_custom_call.1']
    #allocation5 [shape = 'u8[1024]{0}', space=vmem, size = 0x400, scoped, tag = 'input window, operand 1, single buffered']
    #allocation6 [shape = 's32[1]{0}', space=sflag, size = 0x4, scoped, tag = 'scoped memory for tpu_custom_call.1']
    #allocation7 [shape = 'u8[16384]{0}', space=vmem, size = 0x4000, scoped, tag = 'input window, operand 2, single buffered']
    #allocation8 [shape = 'u8[16384]{0}', space=vmem, size = 0x4000, scoped, tag = 'input window, operand 4, single buffered']
    #allocation9 [shape = 's32[1]{0}', space=sflag, size = 0x4, scoped, tag = 'scoped memory for tpu_custom_call.1']
    #allocation10 [shape = 'u8[8192]{0}', space=vmem, size = 0x2000, scoped, tag = 'output window, operand 0, single buffered']
    %11 = vsyncpa [#allocation3], 0
    %12 = vsyncpa [#allocation6], 0
    %13 = vsyncpa [#allocation9], 0
    %14 = vsyncpa [#allocation4], 0
    // Predicated region
    $region2: #{tpu_custom_call.1} parent=1 // pred_check
      _
    $region3: #{tpu_custom_call.1} parent=1 // pred_check_branch
      %16 = sbr.rel (0) target = $region5
    $region4: #{tpu_custom_call.1} parent=1 // pred_region
      %s18 = ssub.s32 256, 256
      %19 = vsyncadd [#allocation3], %s18
      %s20 = sshll.u32 [#allocation2], 4
      %s21 = int_to_ptr.vmem [resolvable:$true] %s20
      %26 = dma.hbm_to_vmem [thread:$0]  %s0, 256, %s21, [#allocation3], 128, 128, 8
    $region5: #{tpu_custom_call.1} parent=1 // pred_fallthru
      _
    // Predicated region
    $region6: #{tpu_custom_call.1} parent=1 // pred_check
      _
    $region7: #{tpu_custom_call.1} parent=1 // pred_check_branch
      %28 = sbr.rel (0) target = $region9
    $region8: #{tpu_custom_call.1} parent=1 // pred_region
      %s30 = ssub.s32 32, 32
      %31 = vsyncadd [#allocation6], %s30
      %s33 = sshll.u32 [#allocation5], 4
      %s34 = int_to_ptr.vmem [resolvable:$true] %s33
      %36 = dma.hbm_to_vmem [thread:$0]  %s1, 32, %s34, [#allocation6]
    $region9: #{tpu_custom_call.1} parent=1 // pred_fallthru
      _
    // Predicated region
    $region10: #{tpu_custom_call.1} parent=1 // pred_check
      _
    $region11: #{tpu_custom_call.1} parent=1 // pred_check_branch
      %38 = sbr.rel (0) target = $region13
    $region12: #{tpu_custom_call.1} parent=1 // pred_region
      %s40 = ssub.s32 512, 512
      %41 = vsyncadd [#allocation6], %s40
      %s42 = sshll.u32 [#allocation7], 4
      %s43 = int_to_ptr.vmem [resolvable:$true] %s42
      %48 = dma.hbm_to_vmem [thread:$0]  %s2, 512, %s43, [#allocation6], 128, 128, 8
    $region13: #{tpu_custom_call.1} parent=1 // pred_fallthru
      _
    // Predicated region
    $region14: #{tpu_custom_call.1} parent=1 // pred_check
      _
    $region15: #{tpu_custom_call.1} parent=1 // pred_check_branch
      %50 = sbr.rel (0) target = $region17
    $region16: #{tpu_custom_call.1} parent=1 // pred_region
      _
    $region17: #{tpu_custom_call.1} parent=1 // pred_fallthru
      _
    // Predicated region
    $region18: #{tpu_custom_call.1} parent=1 // pred_check
      _
    $region19: #{tpu_custom_call.1} parent=1 // pred_check_branch
      %52 = sbr.rel (0) target = $region21
    $region20: #{tpu_custom_call.1} parent=1 // pred_region
      %s54 = ssub.s32 512, 512
      %55 = vsyncadd [#allocation9], %s54
      %s56 = sshll.u32 [#allocation8], 4
      %s57 = int_to_ptr.vmem [resolvable:$true] %s56
      %62 = dma.hbm_to_vmem [thread:$0]  %s4, 512, %s57, [#allocation9], 128, 128, 8
    $region21: #{tpu_custom_call.1} parent=1 // pred_fallthru
      _
    // Predicated region
    $region22: #{tpu_custom_call.1} parent=1 // pred_check
      _
    $region23: #{tpu_custom_call.1} parent=1 // pred_check_branch
      %64 = sbr.rel (0) target = $region25
    $region24: #{tpu_custom_call.1} parent=1 // pred_region
      _
    $region25: #{tpu_custom_call.1} parent=1 // pred_fallthru
      _
    // Predicated region
    $region26: #{tpu_custom_call.1} parent=1 // pred_check
      _
    $region27: #{tpu_custom_call.1} parent=1 // pred_check_branch
      %66 = sbr.rel (0) target = $region29
    $region28: #{tpu_custom_call.1} parent=1 // pred_region
      %67 = dma.done [#allocation3], 256
    $region29: #{tpu_custom_call.1} parent=1 // pred_fallthru
      _
    // Predicated region
    $region30: #{tpu_custom_call.1} parent=1 // pred_check
      _
    $region31: #{tpu_custom_call.1} parent=1 // pred_check_branch
      %69 = sbr.rel (0) target = $region33
    $region32: #{tpu_custom_call.1} parent=1 // pred_region
      %70 = dma.done [#allocation6], 32
    $region33: #{tpu_custom_call.1} parent=1 // pred_fallthru
      _
    // Predicated region
    $region34: #{tpu_custom_call.1} parent=1 // pred_check
      _
    $region35: #{tpu_custom_call.1} parent=1 // pred_check_branch
      %72 = sbr.rel (0) target = $region37
    $region36: #{tpu_custom_call.1} parent=1 // pred_region
      %73 = dma.done [#allocation6], 512
    $region37: #{tpu_custom_call.1} parent=1 // pred_fallthru
      _
    // Predicated region
    $region38: #{tpu_custom_call.1} parent=1 // pred_check
      _
    $region39: #{tpu_custom_call.1} parent=1 // pred_check_branch
      %75 = sbr.rel (0) target = $region41
    $region40: #{tpu_custom_call.1} parent=1 // pred_region
      %76 = dma.done [#allocation9], 512
    $region41: #{tpu_custom_call.1} parent=1 // pred_fallthru
      _
    %v77 = vld [vmem:[#allocation2] sm:$0xff]
    %v78 = vld [vmem:[#allocation2 + $0x8] sm:$0xff]
    %v79 = vld [vmem:[#allocation5] sm:$0x3]
    %v80 = vld [vmem:[#allocation7] sm:$0xff]
    %v81 = vld [vmem:[#allocation7 + $0x8] sm:$0xff]
    %v82 = vld [vmem:[#allocation7 + $0x10] sm:$0xff]
    %v83 = vld [vmem:[#allocation7 + $0x18] sm:$0xff]
    %v84 = vld [vmem:[%s3] sm:$0x1]
    %v86 = vlaneseq
    %v87 = vshrl.u32 %v86, 7
    %v88 = vsub.s32 0, %v87
    %v89 = vrot.slane %v84, %v88
    %vm91 = vcmask 261120
    %v93 = vsel %vm91, %v77, 0
    %v96 = vsel %vm91, %v78, 0
    %98 = vmatprep.subr.mxu0 0.0
    %99 = vmatpush1.msra.mxu0 0.0
    %100 = vmatprep.subr.mxu0 0.0
    %101 = vmatpush1.msra.mxu0 0.0
    %102 = vmatprep.subr.mxu0 0.0
    %103 = vmatpush1.msra.mxu0 0.0
    %104 = vmatprep.subr.mxu0 0.0
    %105 = vmatpush1.msra.mxu0 0.0
    %106 = vmatprep.subr.mxu0 0.0
    %107 = vmatpush1.msra.mxu0 0.0
    %108 = vmatprep.subr.mxu0 0.0
    %109 = vmatpush1.msra.mxu0 0.0
    %110 = vmatprep.subr.mxu0 0.0
    %111 = vmatpush1.msra.mxu0 0.0
    %112 = vmatprep.subr.mxu0 0.0
    %113 = vmatpush1.msra.mxu0 0.0
    %114 = vmatprep.subr.mxu0 0.0
    %115 = vmatpush1.msra.mxu0 0.0
    %116 = vmatprep.subr.mxu0 0.0
    %117 = vmatpush1.msra.mxu0 0.0
    %118 = vmatprep.subr.mxu0 0.0
    %119 = vmatpush1.msra.mxu0 0.0
    %120 = vmatprep.subr.mxu0 0.0
    %121 = vmatpush1.msra.mxu0 0.0
    %122 = vmatprep.subr.mxu0 0.0
    %123 = vmatpush1.msra.mxu0 %v83
    %124 = vmatprep.subr.mxu0 0.0
    %125 = vmatpush1.msra.mxu0 %v82
    %126 = vmatprep.subr.mxu0 0.0
    %127 = vmatpush1.msra.mxu0 %v81
    %128 = vmatprep.subr.mxu0 0.0
    %129 = vmatpush1.msra.mxu0 %v80
    %130 = vmatprep.subr.mxu0 0.0
    %131 = vmatpush2.msra.mxu0 0.0
    %132 = vmatprep.subr.mxu0 0.0
    %133 = vmatpush2.msra.mxu0 0.0
    %134 = vmatprep.subr.mxu0 0.0
    %135 = vmatpush2.msra.mxu0 0.0
    %136 = vmatprep.subr.mxu0 0.0
    %137 = vmatpush2.msra.mxu0 0.0
    %138 = vmatprep.subr.mxu0 0.0
    %139 = vmatpush2.msra.mxu0 0.0
    %140 = vmatprep.subr.mxu0 0.0
    %141 = vmatpush2.msra.mxu0 0.0
    %142 = vmatprep.subr.mxu0 0.0
    %143 = vmatpush2.msra.mxu0 0.0
    %144 = vmatprep.subr.mxu0 0.0
    %145 = vmatpush2.msra.mxu0 0.0
    %146 = vmatprep.subr.mxu0 0.0
    %147 = vmatpush2.msra.mxu0 0.0
    %148 = vmatprep.subr.mxu0 0.0
    %149 = vmatpush2.msra.mxu0 0.0
    %150 = vmatprep.subr.mxu0 0.0
    %151 = vmatpush2.msra.mxu0 0.0
    %152 = vmatprep.subr.mxu0 0.0
    %153 = vmatpush2.msra.mxu0 0.0
    %154 = vmatprep.subr.mxu0 0.0
    %155 = vmatpush2.msra.mxu0 0.0
    %156 = vmatprep.subr.mxu0 0.0
    %157 = vmatpush2.msra.mxu0 0.0
    %158 = vmatprep.subr.mxu0 0.0
    %159 = vmatpush2.msra.mxu0 0.0
    %160 = vmatprep.subr.mxu0 0.0
    %161 = vmatpush2.msra.mxu0 0.0
    %162 = vmatprep.mubr.f32.mxu0 0.0
    %163 = vmatmul.mubr.f32.gmra.mxu0 %v93
    %v164 = vpop.f32.mrf.mxu0
    %v165 = vadd.f32 %v89, %v164
    %v166 = vpop.f32.mrf.mxu0
    %167 = vmatprep.mubr.f32.mxu0 0.0
    %168 = vmatmul.mubr.f32.gmra.mxu0 %v96
    %v169 = vpop.f32.mrf.mxu0
    %v170 = vadd.f32 %v89, %v169
    %v171 = vpop.f32.mrf.mxu0
    %172 = vdwg.mxu0
    %v173 = vmul.f32 %v165, 0.25
    %v174 = vmul.f32 %v170, 0.25
    %v177 = vunpack.c.l.s4 1966171168
    %v178 = vunpack.c.0.s8 %v177
    %v179 = vlaneseq
    %v180 = vshrl.u32 %v179, 7
    %v181 = vsub.s32 %v178, %v180
    %v182 = vrot.slane %v79, %v181
    %v183 = vcombine.high %v182, %v182
    %v185 = vunpack.c.l.s4 1966171168
    %v186 = vunpack.c.0.s8 %v185
    %v187 = vlaneseq
    %v188 = vshrl.u32 %v187, 7
    %v189 = vsub.s32 %v186, %v188
    %v190 = vrot.slane %v182, %v189
    %v192 = vunpack.c.l.s4 1966171168
    %v193 = vunpack.c.0.s8 %v192
    %v194 = vlaneseq
    %v195 = vshrl.u32 %v194, 7
    %v196 = vsub.s32 %v193, %v195
    %v197 = vrot.slane %v183, %v196
    %v198 = vlaneseq
    %v199 = vshrl.u32 %v198, 7
    %v200 = vsub.s32 0, %v199
    %v201 = vrot.slane %v190, %v200
    %v202 = vlaneseq
    %v203 = vshrl.u32 %v202, 7
    %v204 = vsub.s32 0, %v203
    %v205 = vrot.slane %v197, %v204
    %209 = vrot.lane.b32.xlu0 %v165, 96
    %v210 = vpop.permute.xlu0 %209
    %vm211 = vcmask 130048
    %v213 = vsel %vm211, %v173, 0
    %v215 = vsel %vm211, %v210, 0
    %217 = vmatprep.subr.mxu0 0.0
    %218 = vmatpush1.xpose.msra.mxu0 0.0
    %219 = vmatprep.subr.mxu0 0.0
    %220 = vmatpush1.xpose.msra.mxu0 0.0
    %221 = vmatprep.subr.mxu0 0.0
    %222 = vmatpush1.xpose.msra.mxu0 0.0
    %223 = vmatprep.subr.mxu0 0.0
    %224 = vmatpush1.xpose.msra.mxu0 0.0
    %225 = vmatprep.subr.mxu0 0.0
    %226 = vmatpush1.xpose.msra.mxu0 0.0
    %227 = vmatprep.subr.mxu0 0.0
    %228 = vmatpush1.xpose.msra.mxu0 0.0
    %229 = vmatprep.subr.mxu0 0.0
    %230 = vmatpush1.xpose.msra.mxu0 0.0
    %231 = vmatprep.subr.mxu0 0.0
    %232 = vmatpush1.xpose.msra.mxu0 0.0
    %233 = vmatprep.subr.mxu0 0.0
    %234 = vmatpush1.xpose.msra.mxu0 0.0
    %235 = vmatprep.subr.mxu0 0.0
    %236 = vmatpush1.xpose.msra.mxu0 0.0
    %237 = vmatprep.subr.mxu0 0.0
    %238 = vmatpush1.xpose.msra.mxu0 0.0
    %239 = vmatprep.subr.mxu0 0.0
    %240 = vmatpush1.xpose.msra.mxu0 0.0
    %241 = vmatprep.subr.mxu0 0.0
    %242 = vmatpush1.xpose.msra.mxu0 0.0
    %243 = vmatprep.subr.mxu0 0.0
    %244 = vmatpush1.xpose.msra.mxu0 0.0
    %245 = vmatprep.subr.mxu0 0.0
    %246 = vmatpush1.xpose.msra.mxu0 0.0
    %247 = vmatprep.subr.mxu0 0.0
    %248 = vmatpush1.xpose.msra.mxu0 %v215
    %249 = vmatprep.subr.mxu0 0.0
    %250 = vmatpush2.xpose.msra.mxu0 0.0
    %251 = vmatprep.subr.mxu0 0.0
    %252 = vmatpush2.xpose.msra.mxu0 0.0
    %253 = vmatprep.subr.mxu0 0.0
    %254 = vmatpush2.xpose.msra.mxu0 0.0
    %255 = vmatprep.subr.mxu0 0.0
    %256 = vmatpush2.xpose.msra.mxu0 0.0
    %257 = vmatprep.subr.mxu0 0.0
    %258 = vmatpush2.xpose.msra.mxu0 0.0
    %259 = vmatprep.subr.mxu0 0.0
    %260 = vmatpush2.xpose.msra.mxu0 0.0
    %261 = vmatprep.subr.mxu0 0.0
    %262 = vmatpush2.xpose.msra.mxu0 0.0
    %263 = vmatprep.subr.mxu0 0.0
    %264 = vmatpush2.xpose.msra.mxu0 0.0
    %265 = vmatprep.subr.mxu0 0.0
    %266 = vmatpush2.xpose.msra.mxu0 0.0
    %267 = vmatprep.subr.mxu0 0.0
    %268 = vmatpush2.xpose.msra.mxu0 0.0
    %269 = vmatprep.subr.mxu0 0.0
    %270 = vmatpush2.xpose.msra.mxu0 0.0
    %271 = vmatprep.subr.mxu0 0.0
    %272 = vmatpush2.xpose.msra.mxu0 0.0
    %273 = vmatprep.subr.mxu0 0.0
    %274 = vmatpush2.xpose.msra.mxu0 0.0
    %275 = vmatprep.subr.mxu0 0.0
    %276 = vmatpush2.xpose.msra.mxu0 0.0
    %277 = vmatprep.subr.mxu0 0.0
    %278 = vmatpush2.xpose.msra.mxu0 0.0
    %279 = vmatprep.subr.mxu0 0.0
    %280 = vmatpush2.xpose.msra.mxu0 0.0
    %281 = vmatprep.mubr.f32.mxu0 0.0
    %282 = vmatmul.mubr.f32.gmra.mxu0 %v213
    %v283 = vpop.f32.mrf.mxu0
    %v284 = vadd.f32 %v201, %v283
    %v285 = vpop.f32.mrf.mxu0
    %286 = vdwg.mxu0
    %288 = vrot.lane.b32.xlu0 %v170, 96
    %v289 = vpop.permute.xlu0 %288
    %v291 = vsel %vm211, %v174, 0
    %v293 = vsel %vm211, %v289, 0
    %295 = vmatprep.subr.mxu0 0.0
    %296 = vmatpush1.xpose.msra.mxu0 0.0
    %297 = vmatprep.subr.mxu0 0.0
    %298 = vmatpush1.xpose.msra.mxu0 0.0
    %299 = vmatprep.subr.mxu0 0.0
    %300 = vmatpush1.xpose.msra.mxu0 0.0
    %301 = vmatprep.subr.mxu0 0.0
    %302 = vmatpush1.xpose.msra.mxu0 0.0
    %303 = vmatprep.subr.mxu0 0.0
    %304 = vmatpush1.xpose.msra.mxu0 0.0
    %305 = vmatprep.subr.mxu0 0.0
    %306 = vmatpush1.xpose.msra.mxu0 0.0
    %307 = vmatprep.subr.mxu0 0.0
    %308 = vmatpush1.xpose.msra.mxu0 0.0
    %309 = vmatprep.subr.mxu0 0.0
    %310 = vmatpush1.xpose.msra.mxu0 0.0
    %311 = vmatprep.subr.mxu0 0.0
    %312 = vmatpush1.xpose.msra.mxu0 0.0
    %313 = vmatprep.subr.mxu0 0.0
    %314 = vmatpush1.xpose.msra.mxu0 0.0
    %315 = vmatprep.subr.mxu0 0.0
    %316 = vmatpush1.xpose.msra.mxu0 0.0
    %317 = vmatprep.subr.mxu0 0.0
    %318 = vmatpush1.xpose.msra.mxu0 0.0
    %319 = vmatprep.subr.mxu0 0.0
    %320 = vmatpush1.xpose.msra.mxu0 0.0
    %321 = vmatprep.subr.mxu0 0.0
    %322 = vmatpush1.xpose.msra.mxu0 0.0
    %323 = vmatprep.subr.mxu0 0.0
    %324 = vmatpush1.xpose.msra.mxu0 0.0
    %325 = vmatprep.subr.mxu0 0.0
    %326 = vmatpush1.xpose.msra.mxu0 %v293
    %327 = vmatprep.subr.mxu0 0.0
    %328 = vmatpush2.xpose.msra.mxu0 0.0
    %329 = vmatprep.subr.mxu0 0.0
    %330 = vmatpush2.xpose.msra.mxu0 0.0
    %331 = vmatprep.subr.mxu0 0.0
    %332 = vmatpush2.xpose.msra.mxu0 0.0
    %333 = vmatprep.subr.mxu0 0.0
    %334 = vmatpush2.xpose.msra.mxu0 0.0
    %335 = vmatprep.subr.mxu0 0.0
    %336 = vmatpush2.xpose.msra.mxu0 0.0
    %337 = vmatprep.subr.mxu0 0.0
    %338 = vmatpush2.xpose.msra.mxu0 0.0
    %339 = vmatprep.subr.mxu0 0.0
    %340 = vmatpush2.xpose.msra.mxu0 0.0
    %341 = vmatprep.subr.mxu0 0.0
    %342 = vmatpush2.xpose.msra.mxu0 0.0
    %343 = vmatprep.subr.mxu0 0.0
    %344 = vmatpush2.xpose.msra.mxu0 0.0
    %345 = vmatprep.subr.mxu0 0.0
    %346 = vmatpush2.xpose.msra.mxu0 0.0
    %347 = vmatprep.subr.mxu0 0.0
    %348 = vmatpush2.xpose.msra.mxu0 0.0
    %349 = vmatprep.subr.mxu0 0.0
    %350 = vmatpush2.xpose.msra.mxu0 0.0
    %351 = vmatprep.subr.mxu0 0.0
    %352 = vmatpush2.xpose.msra.mxu0 0.0
    %353 = vmatprep.subr.mxu0 0.0
    %354 = vmatpush2.xpose.msra.mxu0 0.0
    %355 = vmatprep.subr.mxu0 0.0
    %356 = vmatpush2.xpose.msra.mxu0 0.0
    %357 = vmatprep.subr.mxu0 0.0
    %358 = vmatpush2.xpose.msra.mxu0 0.0
    %359 = vmatprep.mubr.f32.mxu0 0.0
    %360 = vmatmul.mubr.f32.gmra.mxu0 %v291
    %v361 = vpop.f32.mrf.mxu0
    %v362 = vadd.f32 %v205, %v361
    %v363 = vpop.f32.mrf.mxu0
    %364 = vdwg.mxu0
    %vm365 = vcmask 64512
    %v366 = vsel %vm365, %v284, -inf
    %367 = vmax.xlane.f32.xlu0 %v366
    %v368 = vpop.xlane.xlu0 %367
    %v369 = vsel %vm365, %v362, -inf
    %370 = vmax.xlane.f32.xlu0 %v369
    %v371 = vpop.xlane.xlu0 %370
    %v372 = vsub.f32 %v284, %v368
    %v373 = vsub.f32 %v362, %v371
    %v374 = vmul.f32 %v372, 1.442695
    %v375 = vpow.pop %v374
    %v376 = vmul.f32 %v373, 1.442695
    %v377 = vpow.pop %v376
    %v378 = vsel %vm365, %v375, 0.0
    %379 = vadd.xlane.f32.xlu0 %v378
    %v380 = vpop.xlane.xlu0 %379
    %v381 = vsel %vm365, %v377, 0.0
    %382 = vadd.xlane.f32.xlu0 %v381
    %v383 = vpop.xlane.xlu0 %382
    %v384 = vrcp.pop %v380
    %v385 = vrcp.pop %v383
    %v386 = vmul.f32 %v375, %v384
    %v387 = vmul.f32 %v377, %v385
    %388 = vrot.lane.b32.xlu0 %v165, 64
    %v389 = vpop.permute.xlu0 %388
    %v392 = vsel %vm365, %v386, 0
    %394 = vmatprep.subr.mxu0 0.0
    %395 = vmatpush1.msra.mxu0 0.0
    %396 = vmatprep.subr.mxu0 0.0
    %397 = vmatpush1.msra.mxu0 0.0
    %398 = vmatprep.subr.mxu0 0.0
    %399 = vmatpush1.msra.mxu0 0.0
    %400 = vmatprep.subr.mxu0 0.0
    %401 = vmatpush1.msra.mxu0 0.0
    %402 = vmatprep.subr.mxu0 0.0
    %403 = vmatpush1.msra.mxu0 0.0
    %404 = vmatprep.subr.mxu0 0.0
    %405 = vmatpush1.msra.mxu0 0.0
    %406 = vmatprep.subr.mxu0 0.0
    %407 = vmatpush1.msra.mxu0 0.0
    %408 = vmatprep.subr.mxu0 0.0
    %409 = vmatpush1.msra.mxu0 0.0
    %410 = vmatprep.subr.mxu0 0.0
    %411 = vmatpush1.msra.mxu0 0.0
    %412 = vmatprep.subr.mxu0 0.0
    %413 = vmatpush1.msra.mxu0 0.0
    %414 = vmatprep.subr.mxu0 0.0
    %415 = vmatpush1.msra.mxu0 0.0
    %416 = vmatprep.subr.mxu0 0.0
    %417 = vmatpush1.msra.mxu0 0.0
    %418 = vmatprep.subr.mxu0 0.0
    %419 = vmatpush1.msra.mxu0 0.0
    %420 = vmatprep.subr.mxu0 0.0
    %421 = vmatpush1.msra.mxu0 0.0
    %422 = vmatprep.subr.mxu0 0.0
    %423 = vmatpush1.msra.mxu0 0.0
    %424 = vmatprep.subr.mxu0 0.0
    %425 = vmatpush1.msra.mxu0 %v389
    %426 = vmatprep.subr.mxu0 0.0
    %427 = vmatpush2.msra.mxu0 0.0
    %428 = vmatprep.subr.mxu0 0.0
    %429 = vmatpush2.msra.mxu0 0.0
    %430 = vmatprep.subr.mxu0 0.0
    %431 = vmatpush2.msra.mxu0 0.0
    %432 = vmatprep.subr.mxu0 0.0
    %433 = vmatpush2.msra.mxu0 0.0
    %434 = vmatprep.subr.mxu0 0.0
    %435 = vmatpush2.msra.mxu0 0.0
    %436 = vmatprep.subr.mxu0 0.0
    %437 = vmatpush2.msra.mxu0 0.0
    %438 = vmatprep.subr.mxu0 0.0
    %439 = vmatpush2.msra.mxu0 0.0
    %440 = vmatprep.subr.mxu0 0.0
    %441 = vmatpush2.msra.mxu0 0.0
    %442 = vmatprep.subr.mxu0 0.0
    %443 = vmatpush2.msra.mxu0 0.0
    %444 = vmatprep.subr.mxu0 0.0
    %445 = vmatpush2.msra.mxu0 0.0
    %446 = vmatprep.subr.mxu0 0.0
    %447 = vmatpush2.msra.mxu0 0.0
    %448 = vmatprep.subr.mxu0 0.0
    %449 = vmatpush2.msra.mxu0 0.0
    %450 = vmatprep.subr.mxu0 0.0
    %451 = vmatpush2.msra.mxu0 0.0
    %452 = vmatprep.subr.mxu0 0.0
    %453 = vmatpush2.msra.mxu0 0.0
    %454 = vmatprep.subr.mxu0 0.0
    %455 = vmatpush2.msra.mxu0 0.0
    %456 = vmatprep.subr.mxu0 0.0
    %457 = vmatpush2.msra.mxu0 0.0
    %458 = vmatprep.mubr.f32.mxu0 0.0
    %459 = vmatmul.mubr.f32.gmra.mxu0 %v392
    %v460 = vpop.f32.mrf.mxu0
    %v461 = vadd.f32 0.0, %v460
    %v462 = vpop.f32.mrf.mxu0
    %463 = vdwg.mxu0
    %464 = vrot.lane.b32.xlu0 %v170, 64
    %v465 = vpop.permute.xlu0 %464
    %v468 = vsel %vm365, %v387, 0
    %470 = vmatprep.subr.mxu0 0.0
    %471 = vmatpush1.msra.mxu0 0.0
    %472 = vmatprep.subr.mxu0 0.0
    %473 = vmatpush1.msra.mxu0 0.0
    %474 = vmatprep.subr.mxu0 0.0
    %475 = vmatpush1.msra.mxu0 0.0
    %476 = vmatprep.subr.mxu0 0.0
    %477 = vmatpush1.msra.mxu0 0.0
    %478 = vmatprep.subr.mxu0 0.0
    %479 = vmatpush1.msra.mxu0 0.0
    %480 = vmatprep.subr.mxu0 0.0
    %481 = vmatpush1.msra.mxu0 0.0
    %482 = vmatprep.subr.mxu0 0.0
    %483 = vmatpush1.msra.mxu0 0.0
    %484 = vmatprep.subr.mxu0 0.0
    %485 = vmatpush1.msra.mxu0 0.0
    %486 = vmatprep.subr.mxu0 0.0
    %487 = vmatpush1.msra.mxu0 0.0
    %488 = vmatprep.subr.mxu0 0.0
    %489 = vmatpush1.msra.mxu0 0.0
    %490 = vmatprep.subr.mxu0 0.0
    %491 = vmatpush1.msra.mxu0 0.0
    %492 = vmatprep.subr.mxu0 0.0
    %493 = vmatpush1.msra.mxu0 0.0
    %494 = vmatprep.subr.mxu0 0.0
    %495 = vmatpush1.msra.mxu0 0.0
    %496 = vmatprep.subr.mxu0 0.0
    %497 = vmatpush1.msra.mxu0 0.0
    %498 = vmatprep.subr.mxu0 0.0
    %499 = vmatpush1.msra.mxu0 0.0
    %500 = vmatprep.subr.mxu0 0.0
    %501 = vmatpush1.msra.mxu0 %v465
    %502 = vmatprep.subr.mxu0 0.0
    %503 = vmatpush2.msra.mxu0 0.0
    %504 = vmatprep.subr.mxu0 0.0
    %505 = vmatpush2.msra.mxu0 0.0
    %506 = vmatprep.subr.mxu0 0.0
    %507 = vmatpush2.msra.mxu0 0.0
    %508 = vmatprep.subr.mxu0 0.0
    %509 = vmatpush2.msra.mxu0 0.0
    %510 = vmatprep.subr.mxu0 0.0
    %511 = vmatpush2.msra.mxu0 0.0
    %512 = vmatprep.subr.mxu0 0.0
    %513 = vmatpush2.msra.mxu0 0.0
    %514 = vmatprep.subr.mxu0 0.0
    %515 = vmatpush2.msra.mxu0 0.0
    %516 = vmatprep.subr.mxu0 0.0
    %517 = vmatpush2.msra.mxu0 0.0
    %518 = vmatprep.subr.mxu0 0.0
    %519 = vmatpush2.msra.mxu0 0.0
    %520 = vmatprep.subr.mxu0 0.0
    %521 = vmatpush2.msra.mxu0 0.0
    %522 = vmatprep.subr.mxu0 0.0
    %523 = vmatpush2.msra.mxu0 0.0
    %524 = vmatprep.subr.mxu0 0.0
    %525 = vmatpush2.msra.mxu0 0.0
    %526 = vmatprep.subr.mxu0 0.0
    %527 = vmatpush2.msra.mxu0 0.0
    %528 = vmatprep.subr.mxu0 0.0
    %529 = vmatpush2.msra.mxu0 0.0
    %530 = vmatprep.subr.mxu0 0.0
    %531 = vmatpush2.msra.mxu0 0.0
    %532 = vmatprep.subr.mxu0 0.0
    %533 = vmatpush2.msra.mxu0 0.0
    %534 = vmatprep.mubr.f32.mxu0 0.0
    %535 = vmatmul.mubr.f32.gmra.mxu0 %v468
    %v536 = vpop.f32.mrf.mxu0
    %v537 = vadd.f32 0.0, %v536
    %v538 = vpop.f32.mrf.mxu0
    %539 = vdwg.mxu0
    %v540 = vld [vmem:[#allocation8] sm:$0xff]
    %v541 = vld [vmem:[#allocation8 + $0x8] sm:$0xff]
    %542 = vrot.lane.b32.xlu0 %v173, 112
    %v543 = vpop.permute.xlu0 %542
    %544 = vrot.lane.b32.xlu0 %v165, 80
    %v545 = vpop.permute.xlu0 %544
    %v546 = vsel %vm211, %v543, 0
    %v548 = vsel %vm211, %v545, 0
    %550 = vmatprep.subr.mxu0 0.0
    %551 = vmatpush1.xpose.msra.mxu0 0.0
    %552 = vmatprep.subr.mxu0 0.0
    %553 = vmatpush1.xpose.msra.mxu0 0.0
    %554 = vmatprep.subr.mxu0 0.0
    %555 = vmatpush1.xpose.msra.mxu0 0.0
    %556 = vmatprep.subr.mxu0 0.0
    %557 = vmatpush1.xpose.msra.mxu0 0.0
    %558 = vmatprep.subr.mxu0 0.0
    %559 = vmatpush1.xpose.msra.mxu0 0.0
    %560 = vmatprep.subr.mxu0 0.0
    %561 = vmatpush1.xpose.msra.mxu0 0.0
    %562 = vmatprep.subr.mxu0 0.0
    %563 = vmatpush1.xpose.msra.mxu0 0.0
    %564 = vmatprep.subr.mxu0 0.0
    %565 = vmatpush1.xpose.msra.mxu0 0.0
    %566 = vmatprep.subr.mxu0 0.0
    %567 = vmatpush1.xpose.msra.mxu0 0.0
    %568 = vmatprep.subr.mxu0 0.0
    %569 = vmatpush1.xpose.msra.mxu0 0.0
    %570 = vmatprep.subr.mxu0 0.0
    %571 = vmatpush1.xpose.msra.mxu0 0.0
    %572 = vmatprep.subr.mxu0 0.0
    %573 = vmatpush1.xpose.msra.mxu0 0.0
    %574 = vmatprep.subr.mxu0 0.0
    %575 = vmatpush1.xpose.msra.mxu0 0.0
    %576 = vmatprep.subr.mxu0 0.0
    %577 = vmatpush1.xpose.msra.mxu0 0.0
    %578 = vmatprep.subr.mxu0 0.0
    %579 = vmatpush1.xpose.msra.mxu0 0.0
    %580 = vmatprep.subr.mxu0 0.0
    %581 = vmatpush1.xpose.msra.mxu0 %v548
    %582 = vmatprep.subr.mxu0 0.0
    %583 = vmatpush2.xpose.msra.mxu0 0.0
    %584 = vmatprep.subr.mxu0 0.0
    %585 = vmatpush2.xpose.msra.mxu0 0.0
    %586 = vmatprep.subr.mxu0 0.0
    %587 = vmatpush2.xpose.msra.mxu0 0.0
    %588 = vmatprep.subr.mxu0 0.0
    %589 = vmatpush2.xpose.msra.mxu0 0.0
    %590 = vmatprep.subr.mxu0 0.0
    %591 = vmatpush2.xpose.msra.mxu0 0.0
    %592 = vmatprep.subr.mxu0 0.0
    %593 = vmatpush2.xpose.msra.mxu0 0.0
    %594 = vmatprep.subr.mxu0 0.0
    %595 = vmatpush2.xpose.msra.mxu0 0.0
    %596 = vmatprep.subr.mxu0 0.0
    %597 = vmatpush2.xpose.msra.mxu0 0.0
    %598 = vmatprep.subr.mxu0 0.0
    %599 = vmatpush2.xpose.msra.mxu0 0.0
    %600 = vmatprep.subr.mxu0 0.0
    %601 = vmatpush2.xpose.msra.mxu0 0.0
    %602 = vmatprep.subr.mxu0 0.0
    %603 = vmatpush2.xpose.msra.mxu0 0.0
    %604 = vmatprep.subr.mxu0 0.0
    %605 = vmatpush2.xpose.msra.mxu0 0.0
    %606 = vmatprep.subr.mxu0 0.0
    %607 = vmatpush2.xpose.msra.mxu0 0.0
    %608 = vmatprep.subr.mxu0 0.0
    %609 = vmatpush2.xpose.msra.mxu0 0.0
    %610 = vmatprep.subr.mxu0 0.0
    %611 = vmatpush2.xpose.msra.mxu0 0.0
    %612 = vmatprep.subr.mxu0 0.0
    %613 = vmatpush2.xpose.msra.mxu0 0.0
    %614 = vmatprep.mubr.f32.mxu0 0.0
    %615 = vmatmul.mubr.f32.gmra.mxu0 %v546
    %v616 = vpop.f32.mrf.mxu0
    %v617 = vadd.f32 %v201, %v616
    %v618 = vpop.f32.mrf.mxu0
    %619 = vdwg.mxu0
    %620 = vrot.lane.b32.xlu0 %v174, 112
    %v621 = vpop.permute.xlu0 %620
    %622 = vrot.lane.b32.xlu0 %v170, 80
    %v623 = vpop.permute.xlu0 %622
    %v624 = vsel %vm211, %v621, 0
    %v626 = vsel %vm211, %v623, 0
    %628 = vmatprep.subr.mxu0 0.0
    %629 = vmatpush1.xpose.msra.mxu0 0.0
    %630 = vmatprep.subr.mxu0 0.0
    %631 = vmatpush1.xpose.msra.mxu0 0.0
    %632 = vmatprep.subr.mxu0 0.0
    %633 = vmatpush1.xpose.msra.mxu0 0.0
    %634 = vmatprep.subr.mxu0 0.0
    %635 = vmatpush1.xpose.msra.mxu0 0.0
    %636 = vmatprep.subr.mxu0 0.0
    %637 = vmatpush1.xpose.msra.mxu0 0.0
    %638 = vmatprep.subr.mxu0 0.0
    %639 = vmatpush1.xpose.msra.mxu0 0.0
    %640 = vmatprep.subr.mxu0 0.0
    %641 = vmatpush1.xpose.msra.mxu0 0.0
    %642 = vmatprep.subr.mxu0 0.0
    %643 = vmatpush1.xpose.msra.mxu0 0.0
    %644 = vmatprep.subr.mxu0 0.0
    %645 = vmatpush1.xpose.msra.mxu0 0.0
    %646 = vmatprep.subr.mxu0 0.0
    %647 = vmatpush1.xpose.msra.mxu0 0.0
    %648 = vmatprep.subr.mxu0 0.0
    %649 = vmatpush1.xpose.msra.mxu0 0.0
    %650 = vmatprep.subr.mxu0 0.0
    %651 = vmatpush1.xpose.msra.mxu0 0.0
    %652 = vmatprep.subr.mxu0 0.0
    %653 = vmatpush1.xpose.msra.mxu0 0.0
    %654 = vmatprep.subr.mxu0 0.0
    %655 = vmatpush1.xpose.msra.mxu0 0.0
    %656 = vmatprep.subr.mxu0 0.0
    %657 = vmatpush1.xpose.msra.mxu0 0.0
    %658 = vmatprep.subr.mxu0 0.0
    %659 = vmatpush1.xpose.msra.mxu0 %v626
    %660 = vmatprep.subr.mxu0 0.0
    %661 = vmatpush2.xpose.msra.mxu0 0.0
    %662 = vmatprep.subr.mxu0 0.0
    %663 = vmatpush2.xpose.msra.mxu0 0.0
    %664 = vmatprep.subr.mxu0 0.0
    %665 = vmatpush2.xpose.msra.mxu0 0.0
    %666 = vmatprep.subr.mxu0 0.0
    %667 = vmatpush2.xpose.msra.mxu0 0.0
    %668 = vmatprep.subr.mxu0 0.0
    %669 = vmatpush2.xpose.msra.mxu0 0.0
    %670 = vmatprep.subr.mxu0 0.0
    %671 = vmatpush2.xpose.msra.mxu0 0.0
    %672 = vmatprep.subr.mxu0 0.0
    %673 = vmatpush2.xpose.msra.mxu0 0.0
    %674 = vmatprep.subr.mxu0 0.0
    %675 = vmatpush2.xpose.msra.mxu0 0.0
    %676 = vmatprep.subr.mxu0 0.0
    %677 = vmatpush2.xpose.msra.mxu0 0.0
    %678 = vmatprep.subr.mxu0 0.0
    %679 = vmatpush2.xpose.msra.mxu0 0.0
    %680 = vmatprep.subr.mxu0 0.0
    %681 = vmatpush2.xpose.msra.mxu0 0.0
    %682 = vmatprep.subr.mxu0 0.0
    %683 = vmatpush2.xpose.msra.mxu0 0.0
    %684 = vmatprep.subr.mxu0 0.0
    %685 = vmatpush2.xpose.msra.mxu0 0.0
    %686 = vmatprep.subr.mxu0 0.0
    %687 = vmatpush2.xpose.msra.mxu0 0.0
    %688 = vmatprep.subr.mxu0 0.0
    %689 = vmatpush2.xpose.msra.mxu0 0.0
    %690 = vmatprep.subr.mxu0 0.0
    %691 = vmatpush2.xpose.msra.mxu0 0.0
    %692 = vmatprep.mubr.f32.mxu0 0.0
    %693 = vmatmul.mubr.f32.gmra.mxu0 %v624
    %v694 = vpop.f32.mrf.mxu0
    %v695 = vadd.f32 %v205, %v694
    %v696 = vpop.f32.mrf.mxu0
    %697 = vdwg.mxu0
    %v698 = vsel %vm365, %v617, -inf
    %699 = vmax.xlane.f32.xlu0 %v698
    %v700 = vpop.xlane.xlu0 %699
    %v701 = vsel %vm365, %v695, -inf
    %702 = vmax.xlane.f32.xlu0 %v701
    %v703 = vpop.xlane.xlu0 %702
    %v704 = vsub.f32 %v617, %v700
    %v705 = vsub.f32 %v695, %v703
    %v706 = vmul.f32 %v704, 1.442695
    %v707 = vpow.pop %v706
    %v708 = vmul.f32 %v705, 1.442695
    %v709 = vpow.pop %v708
    %v710 = vsel %vm365, %v707, 0.0
    %711 = vadd.xlane.f32.xlu0 %v710
    %v712 = vpop.xlane.xlu0 %711
    %v713 = vsel %vm365, %v709, 0.0
    %714 = vadd.xlane.f32.xlu0 %v713
    %v715 = vpop.xlane.xlu0 %714
    %v716 = vrcp.pop %v712
    %v717 = vrcp.pop %v715
    %v718 = vmul.f32 %v707, %v716
    %v719 = vmul.f32 %v709, %v717
    %720 = vrot.lane.b32.xlu0 %v165, 48
    %v721 = vpop.permute.xlu0 %720
    %v724 = vsel %vm365, %v718, 0
    %726 = vmatprep.subr.mxu0 0.0
    %727 = vmatpush1.msra.mxu0 0.0
    %728 = vmatprep.subr.mxu0 0.0
    %729 = vmatpush1.msra.mxu0 0.0
    %730 = vmatprep.subr.mxu0 0.0
    %731 = vmatpush1.msra.mxu0 0.0
    %732 = vmatprep.subr.mxu0 0.0
    %733 = vmatpush1.msra.mxu0 0.0
    %734 = vmatprep.subr.mxu0 0.0
    %735 = vmatpush1.msra.mxu0 0.0
    %736 = vmatprep.subr.mxu0 0.0
    %737 = vmatpush1.msra.mxu0 0.0
    %738 = vmatprep.subr.mxu0 0.0
    %739 = vmatpush1.msra.mxu0 0.0
    %740 = vmatprep.subr.mxu0 0.0
    %741 = vmatpush1.msra.mxu0 0.0
    %742 = vmatprep.subr.mxu0 0.0
    %743 = vmatpush1.msra.mxu0 0.0
    %744 = vmatprep.subr.mxu0 0.0
    %745 = vmatpush1.msra.mxu0 0.0
    %746 = vmatprep.subr.mxu0 0.0
    %747 = vmatpush1.msra.mxu0 0.0
    %748 = vmatprep.subr.mxu0 0.0
    %749 = vmatpush1.msra.mxu0 0.0
    %750 = vmatprep.subr.mxu0 0.0
    %751 = vmatpush1.msra.mxu0 0.0
    %752 = vmatprep.subr.mxu0 0.0
    %753 = vmatpush1.msra.mxu0 0.0
    %754 = vmatprep.subr.mxu0 0.0
    %755 = vmatpush1.msra.mxu0 0.0
    %756 = vmatprep.subr.mxu0 0.0
    %757 = vmatpush1.msra.mxu0 %v721
    %758 = vmatprep.subr.mxu0 0.0
    %759 = vmatpush2.msra.mxu0 0.0
    %760 = vmatprep.subr.mxu0 0.0
    %761 = vmatpush2.msra.mxu0 0.0
    %762 = vmatprep.subr.mxu0 0.0
    %763 = vmatpush2.msra.mxu0 0.0
    %764 = vmatprep.subr.mxu0 0.0
    %765 = vmatpush2.msra.mxu0 0.0
    %766 = vmatprep.subr.mxu0 0.0
    %767 = vmatpush2.msra.mxu0 0.0
    %768 = vmatprep.subr.mxu0 0.0
    %769 = vmatpush2.msra.mxu0 0.0
    %770 = vmatprep.subr.mxu0 0.0
    %771 = vmatpush2.msra.mxu0 0.0
    %772 = vmatprep.subr.mxu0 0.0
    %773 = vmatpush2.msra.mxu0 0.0
    %774 = vmatprep.subr.mxu0 0.0
    %775 = vmatpush2.msra.mxu0 0.0
    %776 = vmatprep.subr.mxu0 0.0
    %777 = vmatpush2.msra.mxu0 0.0
    %778 = vmatprep.subr.mxu0 0.0
    %779 = vmatpush2.msra.mxu0 0.0
    %780 = vmatprep.subr.mxu0 0.0
    %781 = vmatpush2.msra.mxu0 0.0
    %782 = vmatprep.subr.mxu0 0.0
    %783 = vmatpush2.msra.mxu0 0.0
    %784 = vmatprep.subr.mxu0 0.0
    %785 = vmatpush2.msra.mxu0 0.0
    %786 = vmatprep.subr.mxu0 0.0
    %787 = vmatpush2.msra.mxu0 0.0
    %788 = vmatprep.subr.mxu0 0.0
    %789 = vmatpush2.msra.mxu0 0.0
    %790 = vmatprep.mubr.f32.mxu0 0.0
    %791 = vmatmul.mubr.f32.gmra.mxu0 %v724
    %v792 = vpop.f32.mrf.mxu0
    %v793 = vadd.f32 0.0, %v792
    %v794 = vpop.f32.mrf.mxu0
    %795 = vdwg.mxu0
    %796 = vrot.lane.b32.xlu0 %v170, 48
    %v797 = vpop.permute.xlu0 %796
    %v800 = vsel %vm365, %v719, 0
    %802 = vmatprep.subr.mxu0 0.0
    %803 = vmatpush1.msra.mxu0 0.0
    %804 = vmatprep.subr.mxu0 0.0
    %805 = vmatpush1.msra.mxu0 0.0
    %806 = vmatprep.subr.mxu0 0.0
    %807 = vmatpush1.msra.mxu0 0.0
    %808 = vmatprep.subr.mxu0 0.0
    %809 = vmatpush1.msra.mxu0 0.0
    %810 = vmatprep.subr.mxu0 0.0
    %811 = vmatpush1.msra.mxu0 0.0
    %812 = vmatprep.subr.mxu0 0.0
    %813 = vmatpush1.msra.mxu0 0.0
    %814 = vmatprep.subr.mxu0 0.0
    %815 = vmatpush1.msra.mxu0 0.0
    %816 = vmatprep.subr.mxu0 0.0
    %817 = vmatpush1.msra.mxu0 0.0
    %818 = vmatprep.subr.mxu0 0.0
    %819 = vmatpush1.msra.mxu0 0.0
    %820 = vmatprep.subr.mxu0 0.0
    %821 = vmatpush1.msra.mxu0 0.0
    %822 = vmatprep.subr.mxu0 0.0
    %823 = vmatpush1.msra.mxu0 0.0
    %824 = vmatprep.subr.mxu0 0.0
    %825 = vmatpush1.msra.mxu0 0.0
    %826 = vmatprep.subr.mxu0 0.0
    %827 = vmatpush1.msra.mxu0 0.0
    %828 = vmatprep.subr.mxu0 0.0
    %829 = vmatpush1.msra.mxu0 0.0
    %830 = vmatprep.subr.mxu0 0.0
    %831 = vmatpush1.msra.mxu0 0.0
    %832 = vmatprep.subr.mxu0 0.0
    %833 = vmatpush1.msra.mxu0 %v797
    %834 = vmatprep.subr.mxu0 0.0
    %835 = vmatpush2.msra.mxu0 0.0
    %836 = vmatprep.subr.mxu0 0.0
    %837 = vmatpush2.msra.mxu0 0.0
    %838 = vmatprep.subr.mxu0 0.0
    %839 = vmatpush2.msra.mxu0 0.0
    %840 = vmatprep.subr.mxu0 0.0
    %841 = vmatpush2.msra.mxu0 0.0
    %842 = vmatprep.subr.mxu0 0.0
    %843 = vmatpush2.msra.mxu0 0.0
    %844 = vmatprep.subr.mxu0 0.0
    %845 = vmatpush2.msra.mxu0 0.0
    %846 = vmatprep.subr.mxu0 0.0
    %847 = vmatpush2.msra.mxu0 0.0
    %848 = vmatprep.subr.mxu0 0.0
    %849 = vmatpush2.msra.mxu0 0.0
    %850 = vmatprep.subr.mxu0 0.0
    %851 = vmatpush2.msra.mxu0 0.0
    %852 = vmatprep.subr.mxu0 0.0
    %853 = vmatpush2.msra.mxu0 0.0
    %854 = vmatprep.subr.mxu0 0.0
    %855 = vmatpush2.msra.mxu0 0.0
    %856 = vmatprep.subr.mxu0 0.0
    %857 = vmatpush2.msra.mxu0 0.0
    %858 = vmatprep.subr.mxu0 0.0
    %859 = vmatpush2.msra.mxu0 0.0
    %860 = vmatprep.subr.mxu0 0.0
    %861 = vmatpush2.msra.mxu0 0.0
    %862 = vmatprep.subr.mxu0 0.0
    %863 = vmatpush2.msra.mxu0 0.0
    %864 = vmatprep.subr.mxu0 0.0
    %865 = vmatpush2.msra.mxu0 0.0
    %866 = vmatprep.mubr.f32.mxu0 0.0
    %867 = vmatmul.mubr.f32.gmra.mxu0 %v800
    %v868 = vpop.f32.mrf.mxu0
    %v869 = vadd.f32 0.0, %v868
    %v870 = vpop.f32.mrf.mxu0
    %871 = vdwg.mxu0
    %s872 = scalar_lea.vmem [#allocation8], 16
    %v873 = vld [vmem:[%s872] sm:$0xff]
    %v874 = vld [vmem:[%s872 + $0x8] sm:$0xff]
    %v876 = vsel %vm211, %v793, 0
    %v879 = vsel %vm211, %v869, 0
    %881 = vmatprep.subr.mxu0 0.0
    %882 = vmatpush1.msra.mxu0 0.0
    %883 = vmatprep.subr.mxu0 0.0
    %884 = vmatpush1.msra.mxu0 0.0
    %885 = vmatprep.subr.mxu0 0.0
    %886 = vmatpush1.msra.mxu0 0.0
    %887 = vmatprep.subr.mxu0 0.0
    %888 = vmatpush1.msra.mxu0 0.0
    %889 = vmatprep.subr.mxu0 0.0
    %890 = vmatpush1.msra.mxu0 0.0
    %891 = vmatprep.subr.mxu0 0.0
    %892 = vmatpush1.msra.mxu0 0.0
    %893 = vmatprep.subr.mxu0 0.0
    %894 = vmatpush1.msra.mxu0 0.0
    %895 = vmatprep.subr.mxu0 0.0
    %896 = vmatpush1.msra.mxu0 0.0
    %897 = vmatprep.subr.mxu0 0.0
    %898 = vmatpush1.msra.mxu0 0.0
    %899 = vmatprep.subr.mxu0 0.0
    %900 = vmatpush1.msra.mxu0 0.0
    %901 = vmatprep.subr.mxu0 0.0
    %902 = vmatpush1.msra.mxu0 0.0
    %903 = vmatprep.subr.mxu0 0.0
    %904 = vmatpush1.msra.mxu0 0.0
    %905 = vmatprep.subr.mxu0 0.0
    %906 = vmatpush1.msra.mxu0 0.0
    %907 = vmatprep.subr.mxu0 0.0
    %908 = vmatpush1.msra.mxu0 0.0
    %909 = vmatprep.subr.mxu0 0.0
    %910 = vmatpush1.msra.mxu0 %v874
    %911 = vmatprep.subr.mxu0 0.0
    %912 = vmatpush1.msra.mxu0 %v873
    %913 = vmatprep.subr.mxu0 0.0
    %914 = vmatpush2.msra.mxu0 0.0
    %915 = vmatprep.subr.mxu0 0.0
    %916 = vmatpush2.msra.mxu0 0.0
    %917 = vmatprep.subr.mxu0 0.0
    %918 = vmatpush2.msra.mxu0 0.0
    %919 = vmatprep.subr.mxu0 0.0
    %920 = vmatpush2.msra.mxu0 0.0
    %921 = vmatprep.subr.mxu0 0.0
    %922 = vmatpush2.msra.mxu0 0.0
    %923 = vmatprep.subr.mxu0 0.0
    %924 = vmatpush2.msra.mxu0 0.0
    %925 = vmatprep.subr.mxu0 0.0
    %926 = vmatpush2.msra.mxu0 0.0
    %927 = vmatprep.subr.mxu0 0.0
    %928 = vmatpush2.msra.mxu0 0.0
    %929 = vmatprep.subr.mxu0 0.0
    %930 = vmatpush2.msra.mxu0 0.0
    %931 = vmatprep.subr.mxu0 0.0
    %932 = vmatpush2.msra.mxu0 0.0
    %933 = vmatprep.subr.mxu0 0.0
    %934 = vmatpush2.msra.mxu0 0.0
    %935 = vmatprep.subr.mxu0 0.0
    %936 = vmatpush2.msra.mxu0 0.0
    %937 = vmatprep.subr.mxu0 0.0
    %938 = vmatpush2.msra.mxu0 0.0
    %939 = vmatprep.subr.mxu0 0.0
    %940 = vmatpush2.msra.mxu0 0.0
    %941 = vmatprep.subr.mxu0 0.0
    %942 = vmatpush2.msra.mxu0 0.0
    %943 = vmatprep.subr.mxu0 0.0
    %944 = vmatpush2.msra.mxu0 0.0
    %945 = vmatprep.mubr.f32.mxu0 0.0
    %946 = vmatmul.mubr.f32.gmra.mxu0 %v876
    %v947 = vpop.f32.mrf.mxu0
    %v948 = vadd.f32 0.0, %v947
    %v949 = vpop.f32.mrf.mxu0
    %950 = vmatprep.mubr.f32.mxu0 0.0
    %951 = vmatmul.mubr.f32.gmra.mxu0 %v879
    %v952 = vpop.f32.mrf.mxu0
    %v953 = vadd.f32 0.0, %v952
    %v954 = vpop.f32.mrf.mxu0
    %955 = vdwg.mxu0
    %v957 = vsel %vm211, %v461, 0
    %v960 = vsel %vm211, %v537, 0
    %962 = vmatprep.subr.mxu0 0.0
    %963 = vmatpush1.msra.mxu0 0.0
    %964 = vmatprep.subr.mxu0 0.0
    %965 = vmatpush1.msra.mxu0 0.0
    %966 = vmatprep.subr.mxu0 0.0
    %967 = vmatpush1.msra.mxu0 0.0
    %968 = vmatprep.subr.mxu0 0.0
    %969 = vmatpush1.msra.mxu0 0.0
    %970 = vmatprep.subr.mxu0 0.0
    %971 = vmatpush1.msra.mxu0 0.0
    %972 = vmatprep.subr.mxu0 0.0
    %973 = vmatpush1.msra.mxu0 0.0
    %974 = vmatprep.subr.mxu0 0.0
    %975 = vmatpush1.msra.mxu0 0.0
    %976 = vmatprep.subr.mxu0 0.0
    %977 = vmatpush1.msra.mxu0 0.0
    %978 = vmatprep.subr.mxu0 0.0
    %979 = vmatpush1.msra.mxu0 0.0
    %980 = vmatprep.subr.mxu0 0.0
    %981 = vmatpush1.msra.mxu0 0.0
    %982 = vmatprep.subr.mxu0 0.0
    %983 = vmatpush1.msra.mxu0 0.0
    %984 = vmatprep.subr.mxu0 0.0
    %985 = vmatpush1.msra.mxu0 0.0
    %986 = vmatprep.subr.mxu0 0.0
    %987 = vmatpush1.msra.mxu0 0.0
    %988 = vmatprep.subr.mxu0 0.0
    %989 = vmatpush1.msra.mxu0 0.0
    %990 = vmatprep.subr.mxu0 0.0
    %991 = vmatpush1.msra.mxu0 %v541
    %992 = vmatprep.subr.mxu0 0.0
    %993 = vmatpush1.msra.mxu0 %v540
    %994 = vmatprep.subr.mxu0 0.0
    %995 = vmatpush2.msra.mxu0 0.0
    %996 = vmatprep.subr.mxu0 0.0
    %997 = vmatpush2.msra.mxu0 0.0
    %998 = vmatprep.subr.mxu0 0.0
    %999 = vmatpush2.msra.mxu0 0.0
    %1000 = vmatprep.subr.mxu0 0.0
    %1001 = vmatpush2.msra.mxu0 0.0
    %1002 = vmatprep.subr.mxu0 0.0
    %1003 = vmatpush2.msra.mxu0 0.0
    %1004 = vmatprep.subr.mxu0 0.0
    %1005 = vmatpush2.msra.mxu0 0.0
    %1006 = vmatprep.subr.mxu0 0.0
    %1007 = vmatpush2.msra.mxu0 0.0
    %1008 = vmatprep.subr.mxu0 0.0
    %1009 = vmatpush2.msra.mxu0 0.0
    %1010 = vmatprep.subr.mxu0 0.0
    %1011 = vmatpush2.msra.mxu0 0.0
    %1012 = vmatprep.subr.mxu0 0.0
    %1013 = vmatpush2.msra.mxu0 0.0
    %1014 = vmatprep.subr.mxu0 0.0
    %1015 = vmatpush2.msra.mxu0 0.0
    %1016 = vmatprep.subr.mxu0 0.0
    %1017 = vmatpush2.msra.mxu0 0.0
    %1018 = vmatprep.subr.mxu0 0.0
    %1019 = vmatpush2.msra.mxu0 0.0
    %1020 = vmatprep.subr.mxu0 0.0
    %1021 = vmatpush2.msra.mxu0 0.0
    %1022 = vmatprep.subr.mxu0 0.0
    %1023 = vmatpush2.msra.mxu0 0.0
    %1024 = vmatprep.subr.mxu0 0.0
    %1025 = vmatpush2.msra.mxu0 0.0
    %1026 = vmatprep.mubr.f32.mxu0 0.0
    %1027 = vmatmul.mubr.f32.gmra.mxu0 %v957
    %v1028 = vpop.f32.mrf.mxu0
    %v1029 = vadd.f32 %v948, %v1028
    %v1030 = vpop.f32.mrf.mxu0
    %1031 = vmatprep.mubr.f32.mxu0 0.0
    %1032 = vmatmul.mubr.f32.gmra.mxu0 %v960
    %v1033 = vpop.f32.mrf.mxu0
    %v1034 = vadd.f32 %v953, %v1033
    %v1035 = vpop.f32.mrf.mxu0
    %1036 = vdwg.mxu0
    %v1037 = vld [vmem:[%s5] sm:$0x1]
    %v1038 = vlaneseq
    %v1039 = vshrl.u32 %v1038, 7
    %v1040 = vsub.s32 0, %v1039
    %v1041 = vrot.slane %v1037, %v1040
    %v1042 = vadd.f32 %v1029, %v1041
    %v1043 = vadd.f32 %v1034, %v1041
    %v1044 = vadd.f32 %v1042, %v77
    %v1045 = vadd.f32 %v1043, %v78
    %v1046 = vsel %vm91, %v1044, 0.0
    %1047 = vadd.xlane.f32.xlu0 %v1046
    %v1048 = vpop.xlane.xlu0 %1047
    %v1049 = vsel %vm91, %v1045, 0.0
    %1050 = vadd.xlane.f32.xlu0 %v1049
    %v1051 = vpop.xlane.xlu0 %1050
    %v1052 = vrcp.pop 32.0
    %v1053 = vmul.f32 %v1048, %v1052
    %v1054 = vmul.f32 %v1051, %v1052
    %v1055 = vsub.f32 %v1044, %v1053
    %v1056 = vsub.f32 %v1045, %v1054
    %v1057 = vmul.f32 %v1055, %v1055
    %v1058 = vmul.f32 %v1056, %v1056
    %v1059 = vsel %vm91, %v1057, 0.0
    %1060 = vadd.xlane.f32.xlu0 %v1059
    %v1061 = vpop.xlane.xlu0 %1060
    %v1062 = vsel %vm91, %v1058, 0.0
    %1063 = vadd.xlane.f32.xlu0 %v1062
    %v1064 = vpop.xlane.xlu0 %1063
    %v1065 = vmul.f32 %v1061, %v1052
    %v1066 = vmul.f32 %v1064, %v1052
    %v1067 = vadd.f32 %v1065, 1e-12
    %v1068 = vadd.f32 %v1066, 1e-12
    %v1069 = vrsqrt.pop %v1067
    %v1070 = vrsqrt.pop %v1068
    %v1071 = vmul.f32 %v1055, %v1069
    %v1072 = vmul.f32 %v1056, %v1070
    %v1073 = vld [vmem:[%s5 + $0x1] sm:$0x1]
    %v1074 = vlaneseq
    %v1075 = vshrl.u32 %v1074, 7
    %v1076 = vsub.s32 0, %v1075
    %v1077 = vrot.slane %v1073, %v1076
    %v1078 = vmul.f32 %v1071, %v1077
    %v1079 = vmul.f32 %v1072, %v1077
    %v1080 = vld [vmem:[%s5 + $0x2] sm:$0x1]
    %v1081 = vlaneseq
    %v1082 = vshrl.u32 %v1081, 7
    %v1083 = vsub.s32 0, %v1082
    %v1084 = vrot.slane %v1080, %v1083
    %v1085 = vadd.f32 %v1078, %v1084
    %v1086 = vadd.f32 %v1079, %v1084
    %1087 = vst.msk [vmem:[#allocation10] sm:$0xff] %vm91, %v1085
    %1088 = vst.msk [vmem:[#allocation10 + $0x8] sm:$0xff] %vm91, %v1086
    // Predicated region
    $region42: #{tpu_custom_call.1} parent=1 // pred_check
      _
    $region43: #{tpu_custom_call.1} parent=1 // pred_check_branch
      %1090 = sbr.rel (0) target = $region45
    $region44: #{tpu_custom_call.1} parent=1 // pred_region
      %s1092 = ssub.s32 256, 256
      %1093 = vsyncadd [#allocation4], %s1092
      %s1094 = sshll.u32 [#allocation10], 4
      %s1095 = int_to_ptr.vmem [resolvable:$true] %s1094
      %1100 = dma.vmem_to_hbm [thread:$0]  %s1095, 256, %s6, [#allocation4], 128, 128, 8
    $region45: #{tpu_custom_call.1} parent=1 // pred_fallthru
      _
    // Predicated region
    $region46: #{tpu_custom_call.1} parent=1 // pred_check
      _
    $region47: #{tpu_custom_call.1} parent=1 // pred_check_branch
      %1102 = sbr.rel (0) target = $region49
    $region48: #{tpu_custom_call.1} parent=1 // pred_region
      %1103 = dma.done [#allocation4], 256
    $region49: #{tpu_custom_call.1} parent=1 // pred_fallthru
      _
    %1104 = vsyncpa [#allocation3], 1
    %1105 = vsyncpa [#allocation6], 1
    %1106 = vsyncpa [#allocation9], 1
    %1107 = vsyncpa [#allocation4], 1

</llo_original>
